<compile_context>
chip_gen: v6e
topology: v6e:2x2x1
jax: 0.10.0
libtpu: 0.0.40
codegen_flags: <defaults>
</compile_context>

<pallas_src>
import functools

import jax
import jax.lax as lax
import jax.numpy as jnp
from jax.experimental import pallas as pl
from jax.experimental.pallas import tpu as pltpu


def _round_up(x, m):
    return ((x + m - 1) // m) * m


def _pick_batch_tile(b):
    if b >= 512:
        return 256
    if b >= 16:
        # >= 2 grid steps so the "parallel" batch axis shards across both v7x TensorCores.
        return max(8, _round_up(-(-b // 2), 8))
    return max(8, _round_up(b, 8))


def _pick_class_tile(n_out_p, cap=2048):
    """Largest multiple-of-128 divisor of n_out_p not exceeding `cap`."""
    if n_out_p <= cap:
        return n_out_p
    blocks = n_out_p // 128
    best = 1
    for k in range(1, min(cap // 128, blocks) + 1):
        if blocks % k == 0:
            best = k
    return best * 128


def _zsc_kernel(x_ref, wlin_ref, blin_ref, zsw_ref, cb_ref, out_ref, h_ref, *,
                norm_temperature, norm_weight, use_bias):
    # x_ref:    [TB, D_in]        input dtype (f32/bf16), D_in un-padded (full-dim block)
    # wlin_ref: [D_in, zs_dim_p]  bf16 transposed linear weight (resident)
    # blin_ref: [1, zs_dim_p]     f32  linear bias (resident)
    # zsw_ref:  [zs_dim_p, TN]    bf16 column-normalized zs_weight, class tile j
    # cb_ref:   [1]               f32  cls_bias scalar (SMEM)
    # out_ref:  [TB, TN]
    # h_ref:    [TB, zs_dim_p]    bf16 VMEM scratch, reused across class tiles
    j = pl.program_id(1)

    @pl.when(j == 0)
    def _():
        # First matmul + bias + (optional) row L2 normalization, once per batch tile.
        x = x_ref[...].astype(wlin_ref.dtype)                 # in-kernel f32 -> bf16 cast
        h = jnp.dot(x, wlin_ref[...], preferred_element_type=jnp.float32)
        h = h + blin_ref[...]                                 # nn.Linear bias
        if norm_weight:
            # F.normalize(h, p=2, dim=1), eps=1e-12, fused with the temperature scale.
            sq = jnp.sum(h * h, axis=-1, keepdims=True)       # XLU cross-lane reduce
            inv = lax.rsqrt(jnp.maximum(sq, 1e-24))           # EUP; == 1/max(||h||,1e-12)
            h = h * (norm_temperature * inv)
        h_ref[...] = h.astype(h_ref.dtype)

    out = jnp.dot(h_ref[...], zsw_ref[...], preferred_element_type=jnp.float32)
    if use_bias:                                              # Detic USE_BIAS < 0 path
        out = out + cb_ref[0]
    out_ref[...] = out.astype(out_ref.dtype)


def prepare_zero_shot_classifier_params(w_lin, b_lin, zs_weight_raw, *,
                                        norm_weight=True,
                                        param_dtype=jnp.bfloat16):
    """One-time parameter setup (mirrors ZeroShotClassifier.__init__). Not on the hot path.

    w_lin:         [zs_dim, D_in]          PyTorch nn.Linear weight layout
    b_lin:         [zs_dim]                nn.Linear bias
    zs_weight_raw: [zs_dim, num_classes]   before the zero background column
    """
    zs_dim, d_in = w_lin.shape
    num_classes = zs_weight_raw.shape[1]
    n_out = num_classes + 1

    zs_weight = jnp.concatenate(
        [zs_weight_raw.astype(jnp.float32),
         jnp.zeros((zs_dim, 1), dtype=jnp.float32)], axis=1)
    if norm_weight:
        zs_weight = zs_weight / jnp.maximum(
            jnp.linalg.norm(zs_weight, axis=0, keepdims=True), 1e-12)

    zs_dim_p = _round_up(zs_dim, 128)
    n_out_p = _round_up(n_out, 128)

    # Transposed linear weight [D_in, zs_dim_p]. D_in is left un-padded: the kernel's
    # block dim equals the full array dim, which is always legal.
    w_t = jnp.zeros((d_in, zs_dim_p), dtype=param_dtype)
    w_t = w_t.at[:, :zs_dim].set(jnp.transpose(w_lin).astype(param_dtype))

    b2 = jnp.zeros((1, zs_dim_p), dtype=jnp.float32)
    b2 = b2.at[0, :zs_dim].set(b_lin.astype(jnp.float32))

    zsw = jnp.zeros((zs_dim_p, n_out_p), dtype=param_dtype)
    zsw = zsw.at[:zs_dim, :n_out].set(zs_weight.astype(param_dtype))

    return {"w_lin_t": w_t, "b_lin": b2, "zs_weight": zsw,
            "d_in": d_in, "n_out": n_out, "norm_weight": bool(norm_weight)}


def zero_shot_classifier_forward(x, params, *, norm_temperature=50.0,
                                 norm_weight=None, cls_bias=None,
                                 tb=None, class_tile=2048,
                                 out_dtype=jnp.float32, slice_output=True):
    """x: [B, D_in] activations. params: output of prepare_zero_shot_classifier_params.

    cls_bias: optional scalar parameter (Detic USE_BIAS < 0); passed as a kernel operand.
    out_dtype: jnp.bfloat16 halves the dominant output HBM stream if downstream allows it.
    slice_output=False returns the padded [b_pad, n_out_p] block (no extra copy).
    """
    # TODO(synk): the per-call `classifier` argument path (classifier.T column-normalized
    # each call) is not implemented; only the default registered zs_weight path is.
    B, d_in = x.shape
    assert d_in == params["d_in"], (d_in, params["d_in"])
    if norm_weight is None:
        norm_weight = params["norm_weight"]   # keep consistent with zs_weight column-norm

    zs_dim_p = params["w_lin_t"].shape[1]
    n_out_p = params["zs_weight"].shape[1]
    n_out = params["n_out"]

    use_bias = cls_bias is not None
    cb = (jnp.asarray(cls_bias, dtype=jnp.float32).reshape((1,)) if use_bias
          else jnp.zeros((1,), dtype=jnp.float32))

    # Batch tile / batch-only padding (never pads or casts along D_in on the hot path).
    tb = _pick_batch_tile(B) if tb is None else tb
    b_pad = _round_up(B, tb)
    x_in = x if b_pad == B else jnp.pad(x, ((0, b_pad - B), (0, 0)))

    # Class tile: caps VMEM for large vocabularies; single tile for typical Detic sizes.
    tn = _pick_class_tile(n_out_p, class_tile)
    grid = (b_pad // tb, n_out_p // tn)

    x_itemsize = x_in.dtype.itemsize
    out_itemsize = jnp.dtype(out_dtype).itemsize

    # VMEM budget from actual buffer sizes (inputs/outputs double-buffered) + headroom.
    vmem_bytes = (2 * tb * d_in * x_itemsize          # x tiles
                  + 2 * d_in * zs_dim_p * 2           # resident linear weight (bf16)
                  + 2 * zs_dim_p * 4                  # resident linear bias (f32)
                  + 2 * zs_dim_p * tn * 2             # zs_weight class tile (bf16)
                  + 2 * tb * tn * out_itemsize        # output tile
                  + tb * zs_dim_p * 2)                # h scratch (bf16)
    vmem_limit = min(int(vmem_bytes * 1.5) + (4 << 20), 64 << 20)

    cost = pl.CostEstimate(
        flops=2 * b_pad * (d_in * zs_dim_p + zs_dim_p * n_out_p),
        transcendentals=b_pad if norm_weight else 0,
        bytes_accessed=(b_pad * d_in * x_itemsize
                        + d_in * zs_dim_p * 2
                        + zs_dim_p * 4
                        + zs_dim_p * n_out_p * 2
                        + b_pad * n_out_p * out_itemsize),
    )

    kernel = functools.partial(_zsc_kernel,
                               norm_temperature=float(norm_temperature),
                               norm_weight=bool(norm_weight),
                               use_bias=use_bias)

    out = pl.pallas_call(
        kernel,
        out_shape=jax.ShapeDtypeStruct((b_pad, n_out_p), out_dtype),
        grid=grid,
        in_specs=[
            pl.BlockSpec((tb, d_in), lambda i, j: (i, 0)),           # x tile (full D_in)
            pl.BlockSpec((d_in, zs_dim_p), lambda i, j: (0, 0)),     # resident linear W^T
            pl.BlockSpec((1, zs_dim_p), lambda i, j: (0, 0)),        # resident linear bias
            pl.BlockSpec((zs_dim_p, tn), lambda i, j: (0, j)),       # zs_weight class tile
            pl.BlockSpec(memory_space=pltpu.MemorySpace.SMEM),       # cls_bias scalar
        ],
        out_specs=pl.BlockSpec((tb, tn), lambda i, j: (i, j)),
        scratch_shapes=[pltpu.VMEM((tb, zs_dim_p), jnp.bfloat16)],   # h, reused across j
        compiler_params=pltpu.CompilerParams(
            dimension_semantics=("parallel", "arbitrary"),
            vmem_limit_bytes=vmem_limit,
        ),
        cost_estimate=cost,
    )(x_in, params["w_lin_t"], params["b_lin"], params["zs_weight"], cb)

    if not slice_output:
        return out
    if b_pad == B and n_out_p == n_out:
        return out
    return out[:B, :n_out]


def _reference(x, w_lin, b_lin, zs_weight_raw, norm_temperature=50.0):
    zs_dim = w_lin.shape[0]
    zs_weight = jnp.concatenate(
        [zs_weight_raw, jnp.zeros((zs_dim, 1), dtype=jnp.float32)], axis=1)
    zs_weight = zs_weight / jnp.maximum(
        jnp.linalg.norm(zs_weight, axis=0, keepdims=True), 1e-12)
    h = x @ w_lin.T + b_lin
    h = norm_temperature * h / jnp.maximum(
        jnp.linalg.norm(h, axis=1, keepdims=True), 1e-12)
    return h @ zs_weight


if __name__ == "__main__":
    # Small deterministic synthetic config:
    #   input_size (D_in) = 32, zs_weight_dim = 64, num_classes = 16, batch = 8
    key = jax.random.PRNGKey(0)
    k_x, k_w, k_b, k_zs = jax.random.split(key, 4)

    B, D_in, zs_dim, num_classes = 8, 32, 64, 16

    x = jax.random.normal(k_x, (B, D_in), dtype=jnp.float32)

    # nn.Linear(D_in, zs_dim) parameters (deterministic synthetic init).
    w_lin = 0.05 * jax.random.normal(k_w, (zs_dim, D_in), dtype=jnp.float32)
    b_lin = 0.01 * jax.random.normal(k_b, (zs_dim,), dtype=jnp.float32)

    # zs_weight ('rand' path): randn std=0.01, shape [zs_dim, num_classes].
    zs_core = 0.01 * jax.random.normal(k_zs, (zs_dim, num_classes), dtype=jnp.float32)

    # One-time parameter setup (transpose / normalize / pad / bf16) -- NOT the hot path.
    params = prepare_zero_shot_classifier_params(w_lin, b_lin, zs_core, norm_weight=True)

    ref = _reference(x, w_lin, b_lin, zs_core)

    # Default path (no cls_bias).
    out = zero_shot_classifier_forward(x, params, norm_temperature=50.0)
    out = jax.block_until_ready(out)
    assert out.shape == (B, num_classes + 1), out.shape
    # bf16 weights/activations on the MXU -> bf16-appropriate tolerance vs f32 reference.
    assert jnp.allclose(out, ref, atol=2e-1, rtol=2e-2), (
        float(jnp.max(jnp.abs(out - ref))))

    # USE_BIAS < 0 path: cls_bias is a learned scalar parameter, passed as a kernel operand.
    cls_bias = jnp.asarray(-4.6, dtype=jnp.float32)
    out_b = zero_shot_classifier_forward(x, params, norm_temperature=50.0,
                                         cls_bias=cls_bias)
    out_b = jax.block_until_ready(out_b)
    assert jnp.allclose(out_b, ref + cls_bias, atol=2e-1, rtol=3e-2), (
        float(jnp.max(jnp.abs(out_b - (ref + cls_bias)))))

    # TODO(synk): self.counter += 1 is Python-side bookkeeping with no tensor equivalent.
    print("KERNEL_OK")
</pallas_src>

<mosaic_0001>
module attributes {stable_mosaic.version = 11 : i64} {
  func.func @_zsc_kernel(%arg0: i32, %arg1: i32, %arg2: memref<8x32xf32, #tpu.memory_space<vmem>>, %arg3: memref<32x128xbf16, #tpu.memory_space<vmem>>, %arg4: memref<1x128xf32, #tpu.memory_space<vmem>>, %arg5: memref<128x128xbf16, #tpu.memory_space<vmem>>, %arg6: memref<1xf32, #tpu.memory_space<smem>>, %arg7: memref<8x128xf32, #tpu.memory_space<vmem>>, %arg8: memref<8x128xbf16, #tpu.memory_space<vmem>>) attributes {dimension_semantics = [#tpu.dimension_semantics<parallel>, #tpu.dimension_semantics<arbitrary>], iteration_bounds = array<i64: 1, 1>, scalar_prefetch = 0 : i64, scratch_operands = 1 : i64, tpu.core_type = #tpu.core_type<tc>, window_params = [{transform_indices = @transform_0, window_bounds = array<i64: 8, 32>}, {pipeline_mode = #tpu.pipeline_mode<synchronous>, transform_indices = @transform_1, window_bounds = array<i64: 32, 128>}, {pipeline_mode = #tpu.pipeline_mode<synchronous>, transform_indices = @transform_2, window_bounds = array<i64: 1, 128>}, {transform_indices = @transform_3, window_bounds = array<i64: 128, 128>}, {transform_indices = @transform_4, window_bounds = array<i64: 1>}, {transform_indices = @transform_5, window_bounds = array<i64: 8, 128>}]} {
    %c0_i32 = arith.constant 0 : i32
    %0 = arith.cmpi eq, %arg1, %c0_i32 : i32
    %1 = arith.extui %0 : i1 to i32
    %c0_i32_0 = arith.constant 0 : i32
    %2 = arith.cmpi ne, %1, %c0_i32_0 : i32
    scf.if %2 {
      %c0_6 = arith.constant 0 : index
      %c0_7 = arith.constant 0 : index
      %7 = vector.load %arg2[%c0_6, %c0_7] : memref<8x32xf32, #tpu.memory_space<vmem>>, vector<8x32xf32>
      %8 = arith.truncf %7 : vector<8x32xf32> to vector<8x32xbf16>
      %c0_8 = arith.constant 0 : index
      %c0_9 = arith.constant 0 : index
      %9 = vector.load %arg3[%c0_8, %c0_9] : memref<32x128xbf16, #tpu.memory_space<vmem>>, vector<32x128xbf16>
      %cst_10 = arith.constant dense<0.000000e+00> : vector<8x128xf32>
      %10 = tpu.matmul %8, %9, %cst_10 {dimension_numbers = #tpu.dot_dimension_numbers<[1], [0], [0], [1], [0, 0, 1, 1], [], []>} : vector<8x32xbf16>, vector<32x128xbf16>, vector<8x128xf32> -> vector<8x128xf32>
      %c0_11 = arith.constant 0 : index
      %c0_12 = arith.constant 0 : index
      %11 = vector.load %arg4[%c0_11, %c0_12] : memref<1x128xf32, #tpu.memory_space<vmem>>, vector<1x128xf32>
      %12 = vector.broadcast %11 : vector<1x128xf32> to vector<8x128xf32>
      %13 = arith.addf %10, %12 : vector<8x128xf32>
      %14 = arith.mulf %13, %13 : vector<8x128xf32>
      %cst_13 = arith.constant dense<0.000000e+00> : vector<8xf32>
      %15 = vector.multi_reduction <add>, %14, %cst_13 [1] : vector<8x128xf32> to vector<8xf32>
      %16 = vector.shape_cast %15 : vector<8xf32> to vector<8x1xf32>
      %cst_14 = arith.constant 1.000000e-24 : f32
      %17 = vector.broadcast %cst_14 : f32 to vector<8x1xf32>
      %18 = arith.maximumf %16, %17 : vector<8x1xf32>
      %19 = math.rsqrt %18 : vector<8x1xf32>
      %cst_15 = arith.constant 5.000000e+01 : f32
      %20 = vector.broadcast %cst_15 : f32 to vector<8x1xf32>
      %21 = arith.mulf %20, %19 : vector<8x1xf32>
      %22 = vector.broadcast %21 : vector<8x1xf32> to vector<8x128xf32>
      %23 = arith.mulf %13, %22 : vector<8x128xf32>
      %24 = arith.truncf %23 : vector<8x128xf32> to vector<8x128xbf16>
      %c0_16 = arith.constant 0 : index
      %c0_17 = arith.constant 0 : index
      %25 = vector.load %arg8[%c0_16, %c0_17] : memref<8x128xbf16, #tpu.memory_space<vmem>>, vector<8x128xbf16>
      tpu.vector_store %arg8[%c0_16, %c0_17], %24 {strides = array<i32>} : memref<8x128xbf16, #tpu.memory_space<vmem>>, vector<8x128xbf16>,
    } else {
    }
    %c0 = arith.constant 0 : index
    %c0_1 = arith.constant 0 : index
    %3 = vector.load %arg8[%c0, %c0_1] : memref<8x128xbf16, #tpu.memory_space<vmem>>, vector<8x128xbf16>
    %c0_2 = arith.constant 0 : index
    %c0_3 = arith.constant 0 : index
    %4 = vector.load %arg5[%c0_2, %c0_3] : memref<128x128xbf16, #tpu.memory_space<vmem>>, vector<128x128xbf16>
    %cst = arith.constant dense<0.000000e+00> : vector<8x128xf32>
    %5 = tpu.matmul %3, %4, %cst {dimension_numbers = #tpu.dot_dimension_numbers<[1], [0], [0], [1], [0, 0, 1, 1], [], []>} : vector<8x128xbf16>, vector<128x128xbf16>, vector<8x128xf32> -> vector<8x128xf32>
    %c0_4 = arith.constant 0 : index
    %c0_5 = arith.constant 0 : index
    %6 = vector.load %arg7[%c0_4, %c0_5] : memref<8x128xf32, #tpu.memory_space<vmem>>, vector<8x128xf32>
    tpu.vector_store %arg7[%c0_4, %c0_5], %5 {strides = array<i32>} : memref<8x128xf32, #tpu.memory_space<vmem>>, vector<8x128xf32>,
    return
  }
  func.func @transform_0(%arg0: i32, %arg1: i32) -> (i32, i32) {
    %c0_i32 = arith.constant 0 : i32
    %c0_i32_0 = arith.constant 0 : i32
    return %arg0, %c0_i32 : i32, i32
  }
  func.func @transform_1(%arg0: i32, %arg1: i32) -> (i32, i32) {
    %c0_i32 = arith.constant 0 : i32
    %c0_i32_0 = arith.constant 0 : i32
    %c0_i32_1 = arith.constant 0 : i32
    return %c0_i32, %c0_i32_0 : i32, i32
  }
  func.func @transform_2(%arg0: i32, %arg1: i32) -> (i32, i32) {
    %c0_i32 = arith.constant 0 : i32
    %c0_i32_0 = arith.constant 0 : i32
    %c0_i32_1 = arith.constant 0 : i32
    return %c0_i32, %c0_i32_0 : i32, i32
  }
  func.func @transform_3(%arg0: i32, %arg1: i32) -> (i32, i32) {
    %c0_i32 = arith.constant 0 : i32
    %c0_i32_0 = arith.constant 0 : i32
    return %c0_i32, %arg1 : i32, i32
  }
  func.func @transform_4(%arg0: i32, %arg1: i32) -> i32 {
    %c0_i32 = arith.constant 0 : i32
    %c0_i32_0 = arith.constant 0 : i32
    return %c0_i32 : i32
  }
  func.func @transform_5(%arg0: i32, %arg1: i32) -> (i32, i32) {
    %c0_i32 = arith.constant 0 : i32
    return %arg0, %arg1 : i32, i32
  }
}

</mosaic_0001>

<llo_original>
// kernel: tpu_custom_call.1
$region0: #{tpu_custom_call.1}
  #allocation0 [shape = 'u32[]', space=smem, size = 0x4, offset = 0x4, fixed_abs, tag = 'smem constant byte address 0x4 - core index']
  #allocation1 [shape = 'u32[144,128]{1,0:T(1,128)}', space=vmem, size = 0x12000, scoped, tag = 'internal scratch']
  #allocation2 [shape = 'bf16[8,128]{1,0:T(8,128)(2,1)}', space=vmem, size = 0x800, scoped, tag = 'scratch operand']
  #allocation3 [shape = 'f32[1]{0:T(128)S(6)}', space=smem, size = 0x200, scoped, tag = 'scoped memory for tpu_custom_call.1']
  %s0 = inlined_call_operand.hbm [shape: f32[8,32], index: 0, kind: input, shape index: {}]
  %s1 = inlined_call_operand.hbm [shape: bf16[32,128], index: 1, kind: input, shape index: {}]
  %s2 = inlined_call_operand.vmem [shape: f32[1,128], index: 2, kind: input, shape index: {}]
  %s3 = inlined_call_operand.hbm [shape: bf16[128,128], index: 3, kind: input, shape index: {}]
  %s4 = inlined_call_operand.<no memory space> [shape: f32[1], index: 4, kind: input, shape index: {}]
  %s5 = inlined_call_operand.hbm [shape: f32[8,128], index: 5, kind: output, shape index: {}]
  %s6 = sld [smem:[#allocation0]]
  $region46: #{tpu_custom_call.1} parent=0
    _
  %s8 = ssub.s32 1, %s6
  %s9 = scalar_select 0, %s8, %s6
  %10 = sst [smem:[#allocation3]] %s4
  $region1: #{tpu_custom_call.1} parent=0
    #allocation4 [shape = 'u8[4096]{0}', space=vmem, size = 0x1000, scoped, tag = 'input window, operand 0, single buffered']
    #allocation5 [shape = 's32[1]{0}', space=sflag, size = 0x4, scoped, tag = 'scoped memory for tpu_custom_call.1']
    #allocation6 [shape = 's32[1]{0}', space=sflag, size = 0x4, scoped, tag = 'scoped memory for tpu_custom_call.1']
    #allocation7 [shape = 'u8[8192]{0}', space=vmem, size = 0x2000, scoped, tag = 'input window, operand 1, single buffered']
    #allocation8 [shape = 's32[1]{0}', space=sflag, size = 0x4, scoped, tag = 'scoped memory for tpu_custom_call.1']
    #allocation9 [shape = 'u8[32768]{0}', space=vmem, size = 0x8000, scoped, tag = 'input window, operand 3, single buffered']
    #allocation10 [shape = 'u8[4096]{0}', space=vmem, size = 0x1000, scoped, tag = 'output window, operand 0, single buffered']
    %11 = vsyncpa [#allocation5], 0
    %12 = vsyncpa [#allocation8], 0
    %13 = vsyncpa [#allocation6], 0
    // Predicated region
    $region2: #{tpu_custom_call.1} parent=1 // pred_check
      _
    $region3: #{tpu_custom_call.1} parent=1 // pred_check_branch
      %15 = sbr.rel (0) target = $region5
    $region4: #{tpu_custom_call.1} parent=1 // pred_region
      %s17 = ssub.s32 128, 128
      %18 = vsyncadd [#allocation5], %s17
      %s20 = sshll.u32 [#allocation4], 4
      %s21 = int_to_ptr.vmem [resolvable:$true] %s20
      %23 = dma.hbm_to_vmem [thread:$0]  %s0, 128, %s21, [#allocation5]
    $region5: #{tpu_custom_call.1} parent=1 // pred_fallthru
      _
    // Predicated region
    $region6: #{tpu_custom_call.1} parent=1 // pred_check
      _
    $region7: #{tpu_custom_call.1} parent=1 // pred_check_branch
      %25 = sbr.rel (0) target = $region9
    $region8: #{tpu_custom_call.1} parent=1 // pred_region
      %s27 = ssub.s32 256, 256
      %28 = vsyncadd [#allocation8], %s27
      %s29 = sshll.u32 [#allocation7], 4
      %s30 = int_to_ptr.vmem [resolvable:$true] %s29
      %35 = dma.hbm_to_vmem [thread:$0]  %s1, 256, %s30, [#allocation8], 64, 64, 4
    $region9: #{tpu_custom_call.1} parent=1 // pred_fallthru
      _
    // Predicated region
    $region10: #{tpu_custom_call.1} parent=1 // pred_check
      _
    $region11: #{tpu_custom_call.1} parent=1 // pred_check_branch
      %37 = sbr.rel (0) target = $region13
    $region12: #{tpu_custom_call.1} parent=1 // pred_region
      _
    $region13: #{tpu_custom_call.1} parent=1 // pred_fallthru
      _
    // Predicated region
    $region14: #{tpu_custom_call.1} parent=1 // pred_check
      _
    $region15: #{tpu_custom_call.1} parent=1 // pred_check_branch
      %39 = sbr.rel (0) target = $region17
    $region16: #{tpu_custom_call.1} parent=1 // pred_region
      %s41 = ssub.s32 1024, 1024
      %42 = vsyncadd [#allocation8], %s41
      %s43 = sshll.u32 [#allocation9], 4
      %s44 = int_to_ptr.vmem [resolvable:$true] %s43
      %49 = dma.hbm_to_vmem [thread:$0]  %s3, 1024, %s44, [#allocation8], 64, 64, 4
    $region17: #{tpu_custom_call.1} parent=1 // pred_fallthru
      _
    // Predicated region
    $region18: #{tpu_custom_call.1} parent=1 // pred_check
      _
    $region19: #{tpu_custom_call.1} parent=1 // pred_check_branch
      %51 = sbr.rel (0) target = $region21
    $region20: #{tpu_custom_call.1} parent=1 // pred_region
      _
    $region21: #{tpu_custom_call.1} parent=1 // pred_fallthru
      _
    // Predicated region
    $region22: #{tpu_custom_call.1} parent=1 // pred_check
      _
    $region23: #{tpu_custom_call.1} parent=1 // pred_check_branch
      %53 = sbr.rel (0) target = $region25
    $region24: #{tpu_custom_call.1} parent=1 // pred_region
      %54 = dma.done [#allocation5], 128
    $region25: #{tpu_custom_call.1} parent=1 // pred_fallthru
      _
    // Predicated region
    $region26: #{tpu_custom_call.1} parent=1 // pred_check
      _
    $region27: #{tpu_custom_call.1} parent=1 // pred_check_branch
      %56 = sbr.rel (0) target = $region29
    $region28: #{tpu_custom_call.1} parent=1 // pred_region
      %57 = dma.done [#allocation8], 256
    $region29: #{tpu_custom_call.1} parent=1 // pred_fallthru
      _
    // Predicated region
    $region30: #{tpu_custom_call.1} parent=1 // pred_check
      _
    $region31: #{tpu_custom_call.1} parent=1 // pred_check_branch
      %59 = sbr.rel (0) target = $region33
    $region32: #{tpu_custom_call.1} parent=1 // pred_region
      %60 = dma.done [#allocation8], 1024
    $region33: #{tpu_custom_call.1} parent=1 // pred_fallthru
      _
    %p62 = scmp.eq.s32.totalorder 0, 0
    // Predicated region
    $region34: #{tpu_custom_call.1} parent=1 // pred_check
      %p63 = pneg %p62
    $region35: #{tpu_custom_call.1} parent=1 // pred_check_branch
      %65 = sbr.rel (%p63) target = $region37
    $region36: #{tpu_custom_call.1} parent=1 // pred_region
      %v66 = vld [vmem:[#allocation4] sm:$0xff]
      %v67 = vpack.c.bf16 %v66, %v66
      %v68 = vld [vmem:[#allocation7] sm:$0xf]
      %v69 = vld [vmem:[#allocation7 + $0x4] sm:$0xf]
      %v70 = vld [vmem:[#allocation7 + $0x8] sm:$0xf]
      %v71 = vld [vmem:[#allocation7 + $0xc] sm:$0xf]
      %v72 = vld [vmem:[%s2] sm:$0x1]
      %v74 = vlaneseq
      %v75 = vshrl.u32 %v74, 7
      %v76 = vsub.s32 0, %v75
      %v77 = vrot.slane %v72, %v76
      %v83 = vunpack.c.l.b16 %v68
      %v84 = vunpack.c.l.b16 %v69
      %v85 = vunpack.c.l.b16 %v70
      %v86 = vunpack.c.l.b16 %v71
      %v87 = vpack.c.b16 %v84, %v83
      %v88 = vpack.c.b16 %v86, %v85
      %vm91 = vcmask 261120
      %v93 = vsel %vm91, %v67, 0
      %95 = vmatprep.subr.bf16.mxu0 0
      %96 = vmatpush1.bf16.msra.mxu0 0
      %97 = vmatprep.subr.bf16.mxu0 0
      %98 = vmatpush1.bf16.msra.mxu0 0
      %99 = vmatprep.subr.bf16.mxu0 0
      %100 = vmatpush1.bf16.msra.mxu0 0
      %101 = vmatprep.subr.bf16.mxu0 0
      %102 = vmatpush1.bf16.msra.mxu0 0
      %103 = vmatprep.subr.bf16.mxu0 0
      %104 = vmatpush1.bf16.msra.mxu0 0
      %105 = vmatprep.subr.bf16.mxu0 0
      %106 = vmatpush1.bf16.msra.mxu0 0
      %107 = vmatprep.subr.bf16.mxu0 0
      %108 = vmatpush1.bf16.msra.mxu0 %v88
      %109 = vmatprep.subr.bf16.mxu0 0
      %110 = vmatpush1.bf16.msra.mxu0 %v87
      %111 = vmatprep.subr.bf16.mxu0 0
      %112 = vmatpush2.bf16.msra.mxu0 0
      %113 = vmatprep.subr.bf16.mxu0 0
      %114 = vmatpush2.bf16.msra.mxu0 0
      %115 = vmatprep.subr.bf16.mxu0 0
      %116 = vmatpush2.bf16.msra.mxu0 0
      %117 = vmatprep.subr.bf16.mxu0 0
      %118 = vmatpush2.bf16.msra.mxu0 0
      %119 = vmatprep.subr.bf16.mxu0 0
      %120 = vmatpush2.bf16.msra.mxu0 0
      %121 = vmatprep.subr.bf16.mxu0 0
      %122 = vmatpush2.bf16.msra.mxu0 0
      %123 = vmatprep.subr.bf16.mxu0 0
      %124 = vmatpush2.bf16.msra.mxu0 0
      %125 = vmatprep.subr.bf16.mxu0 0
      %126 = vmatpush2.bf16.msra.mxu0 0
      %127 = vmatprep.mubr.bf16.mxu0 0
      %128 = vmatmul.mubr.bf16.gmra.mxu0 %v93
      %v129 = vpop.f32.mrf.mxu0
      %v130 = vadd.f32 %v77, %v129
      %v131 = vpop.f32.mrf.mxu0
      %v132 = vpop.f32.mrf.mxu0
      %v133 = vpop.f32.mrf.mxu0
      %134 = vdwg.mxu0
      %v135 = vmul.f32 %v130, %v130
      %136 = vadd.xlane.f32.xlu0 %v135
      %v137 = vpop.xlane.xlu0 %136
      %v138 = vmax.f32 %v137, 1e-24
      %v139 = vrsqrt.pop %v138
      %v140 = vmul.f32 %v139, 50.0
      %v141 = vmul.f32 %v130, %v140
      %v142 = vpack.c.bf16 %v141, %v141
      %143 = vst [vmem:[#allocation2] sm:$0xf] %v142
    $region37: #{tpu_custom_call.1} parent=1 // pred_fallthru
      _
    %v144 = vld [vmem:[#allocation2] sm:$0xf]
    %v145 = vld [vmem:[#allocation9] sm:$0xf]
    %v146 = vld [vmem:[#allocation9 + $0x4] sm:$0xf]
    %v147 = vld [vmem:[#allocation9 + $0x8] sm:$0xf]
    %v148 = vld [vmem:[#allocation9 + $0xc] sm:$0xf]
    %v149 = vld [vmem:[#allocation9 + $0x10] sm:$0xf]
    %v150 = vld [vmem:[#allocation9 + $0x14] sm:$0xf]
    %v151 = vld [vmem:[#allocation9 + $0x18] sm:$0xf]
    %v152 = vld [vmem:[#allocation9 + $0x1c] sm:$0xf]
    %v153 = vld [vmem:[#allocation9 + $0x20] sm:$0xf]
    %v154 = vld [vmem:[#allocation9 + $0x24] sm:$0xf]
    %v155 = vld [vmem:[#allocation9 + $0x28] sm:$0xf]
    %v156 = vld [vmem:[#allocation9 + $0x2c] sm:$0xf]
    %v157 = vld [vmem:[#allocation9 + $0x30] sm:$0xf]
    %v158 = vld [vmem:[#allocation9 + $0x34] sm:$0xf]
    %v159 = vld [vmem:[#allocation9 + $0x38] sm:$0xf]
    %v160 = vld [vmem:[#allocation9 + $0x3c] sm:$0xf]
    %v177 = vunpack.c.l.b16 %v145
    %v178 = vunpack.c.l.b16 %v146
    %v179 = vunpack.c.l.b16 %v147
    %v180 = vunpack.c.l.b16 %v148
    %v181 = vunpack.c.l.b16 %v149
    %v182 = vunpack.c.l.b16 %v150
    %v183 = vunpack.c.l.b16 %v151
    %v184 = vunpack.c.l.b16 %v152
    %v185 = vunpack.c.l.b16 %v153
    %v186 = vunpack.c.l.b16 %v154
    %v187 = vunpack.c.l.b16 %v155
    %v188 = vunpack.c.l.b16 %v156
    %v189 = vunpack.c.l.b16 %v157
    %v190 = vunpack.c.l.b16 %v158
    %v191 = vunpack.c.l.b16 %v159
    %v192 = vunpack.c.l.b16 %v160
    %v193 = vpack.c.b16 %v178, %v177
    %v194 = vpack.c.b16 %v180, %v179
    %v195 = vpack.c.b16 %v182, %v181
    %v196 = vpack.c.b16 %v184, %v183
    %v197 = vpack.c.b16 %v186, %v185
    %v198 = vpack.c.b16 %v188, %v187
    %v199 = vpack.c.b16 %v190, %v189
    %v200 = vpack.c.b16 %v192, %v191
    %209 = vmatprep.subr.bf16.mxu0 0
    %210 = vmatpush1.bf16.msra.mxu0 %v200
    %211 = vmatprep.subr.bf16.mxu0 0
    %212 = vmatpush1.bf16.msra.mxu0 %v199
    %213 = vmatprep.subr.bf16.mxu0 0
    %214 = vmatpush1.bf16.msra.mxu0 %v198
    %215 = vmatprep.subr.bf16.mxu0 0
    %216 = vmatpush1.bf16.msra.mxu0 %v197
    %217 = vmatprep.subr.bf16.mxu0 0
    %218 = vmatpush1.bf16.msra.mxu0 %v196
    %219 = vmatprep.subr.bf16.mxu0 0
    %220 = vmatpush1.bf16.msra.mxu0 %v195
    %221 = vmatprep.subr.bf16.mxu0 0
    %222 = vmatpush1.bf16.msra.mxu0 %v194
    %223 = vmatprep.subr.bf16.mxu0 0
    %224 = vmatpush1.bf16.msra.mxu0 %v193
    %225 = vmatprep.subr.bf16.mxu0 0
    %226 = vmatpush2.bf16.msra.mxu0 0
    %227 = vmatprep.subr.bf16.mxu0 0
    %228 = vmatpush2.bf16.msra.mxu0 0
    %229 = vmatprep.subr.bf16.mxu0 0
    %230 = vmatpush2.bf16.msra.mxu0 0
    %231 = vmatprep.subr.bf16.mxu0 0
    %232 = vmatpush2.bf16.msra.mxu0 0
    %233 = vmatprep.subr.bf16.mxu0 0
    %234 = vmatpush2.bf16.msra.mxu0 0
    %235 = vmatprep.subr.bf16.mxu0 0
    %236 = vmatpush2.bf16.msra.mxu0 0
    %237 = vmatprep.subr.bf16.mxu0 0
    %238 = vmatpush2.bf16.msra.mxu0 0
    %239 = vmatprep.subr.bf16.mxu0 0
    %240 = vmatpush2.bf16.msra.mxu0 0
    %241 = vmatprep.mubr.bf16.mxu0 0
    %242 = vmatmul.mubr.bf16.gmra.mxu0 %v144
    %v243 = vpop.f32.mrf.mxu0
    %v244 = vadd.f32 0.0, %v243
    %v245 = vpop.f32.mrf.mxu0
    %v246 = vpop.f32.mrf.mxu0
    %v247 = vpop.f32.mrf.mxu0
    %248 = vdwg.mxu0
    %249 = vst [vmem:[#allocation10] sm:$0xff] %v244
    // Predicated region
    $region38: #{tpu_custom_call.1} parent=1 // pred_check
      _
    $region39: #{tpu_custom_call.1} parent=1 // pred_check_branch
      %251 = sbr.rel (0) target = $region41
    $region40: #{tpu_custom_call.1} parent=1 // pred_region
      %s253 = ssub.s32 128, 128
      %254 = vsyncadd [#allocation6], %s253
      %s256 = sshll.u32 [#allocation10], 4
      %s257 = int_to_ptr.vmem [resolvable:$true] %s256
      %259 = dma.vmem_to_hbm [thread:$0]  %s257, 128, %s5, [#allocation6]
    $region41: #{tpu_custom_call.1} parent=1 // pred_fallthru
      _
    // Predicated region
    $region42: #{tpu_custom_call.1} parent=1 // pred_check
      _
    $region43: #{tpu_custom_call.1} parent=1 // pred_check_branch
      %261 = sbr.rel (0) target = $region45
    $region44: #{tpu_custom_call.1} parent=1 // pred_region
      %262 = dma.done [#allocation6], 128
    $region45: #{tpu_custom_call.1} parent=1 // pred_fallthru
      _
    %263 = vsyncpa [#allocation5], 1
    %264 = vsyncpa [#allocation8], 1
    %265 = vsyncpa [#allocation6], 1

</llo_original>
